<compile_context>
chip_gen: v7x
topology: tpu7x:2x2x1
jax: 0.10.0
libtpu: 0.0.40
codegen_flags: <defaults>
</compile_context>

<pallas_src>
import functools

import jax
import jax.numpy as jnp
from jax import lax
from jax.experimental import pallas as pl
from jax.experimental.pallas import tpu as pltpu


# ----------------------------------------------------------------------------
# Tiling helper
# ----------------------------------------------------------------------------
def _pick_tile(dim, target, granule):
    """Largest granule-aligned tile <= target that evenly divides `dim`.

    Falls back to the full dim (single block on that axis) when no aligned
    divisor exists, which always satisfies the (8, 128) block constraint.
    """
    if dim <= target:
        return dim
    t = (target // granule) * granule
    while t >= granule:
        if dim % t == 0:
            return t
        t -= granule
    return dim


# ----------------------------------------------------------------------------
# Tiled matmul kernel (used for all projections)
# ----------------------------------------------------------------------------
def matmul_kernel(x_ref, w_ref, o_ref, acc_ref):
    # grid = (M/tm, N/tn, K/tk); K axis is the reduction ("arbitrary") axis.
    @pl.when(pl.program_id(2) == 0)
    def _():
        acc_ref[...] = jnp.zeros_like(acc_ref)

    acc_ref[...] += jnp.dot(
        x_ref[...], w_ref[...], preferred_element_type=jnp.float32
    )

    @pl.when(pl.program_id(2) == pl.num_programs(2) - 1)
    def _():
        o_ref[...] = acc_ref[...].astype(o_ref.dtype)


def linear(x2d, w, out_dtype=jnp.float32):
    """x2d: [M, K], w: [K, N] -> [M, N] (MXU in bf16, f32 accumulation)."""
    x2d = x2d.astype(jnp.bfloat16)
    w = w.astype(jnp.bfloat16)
    M, K = x2d.shape
    K2, N = w.shape
    assert K == K2

    tm = _pick_tile(M, 512, 8)
    tn = _pick_tile(N, 256, 128)
    tk = _pick_tile(K, 512, 128)
    grid = (M // tm, N // tn, K // tk)

    return pl.pallas_call(
        matmul_kernel,
        out_shape=jax.ShapeDtypeStruct((M, N), out_dtype),
        grid=grid,
        in_specs=[
            pl.BlockSpec((tm, tk), lambda i, j, k: (i, k)),
            pl.BlockSpec((tk, tn), lambda i, j, k: (k, j)),
        ],
        out_specs=pl.BlockSpec((tm, tn), lambda i, j, k: (i, j)),
        scratch_shapes=[pltpu.VMEM((tm, tn), jnp.float32)],
        compiler_params=pltpu.CompilerParams(
            dimension_semantics=("parallel", "parallel", "arbitrary")
        ),
    )(x2d, w)


# ----------------------------------------------------------------------------
# Attention (+ fused output projection) kernel
#   grid step = one (batch, query-tile); all heads computed in-kernel.
#   q / k / v are extracted from the source refs with static lane offsets so
#   packed QKV / KV activations never need JAX-level slice copies.
# ----------------------------------------------------------------------------
def attn_kernel(q_ref, *rest, num_heads, scale, q_off, k_loc, v_loc,
                dk_total, dv_total):
    n_kv = len(rest) - 2
    kv_refs = rest[:n_kv]
    wo_ref = rest[-2]
    o_ref = rest[-1]

    # Load each distinct KV source once (bf16).
    kv_vals = [r[0] for r in kv_refs]

    k_src, k_off = k_loc
    v_src, v_off = v_loc

    q_all = q_ref[0][:, q_off:q_off + dk_total]          # bf16 [tq,  Dk]
    k_all = kv_vals[k_src][:, k_off:k_off + dk_total]    # bf16 [Skv, Dk]
    v_all = kv_vals[v_src][:, v_off:v_off + dv_total]    # bf16 [Skv, Dv]
    wo = wo_ref[...]                                     # bf16 [Dv, Dout]

    dk = dk_total // num_heads
    dv = dv_total // num_heads

    acc = jnp.zeros((q_all.shape[0], wo.shape[-1]), dtype=jnp.float32)
    for h in range(num_heads):                           # static head loop
        qh = q_all[:, h * dk:(h + 1) * dk]
        kh = k_all[:, h * dk:(h + 1) * dk]
        vh = v_all[:, h * dv:(h + 1) * dv]

        # logits = (qh @ kh^T) * scale, contracting the last dims directly on
        # the MXU (no in-kernel transpose).
        logits = lax.dot_general(
            qh, kh, (((1,), (1,)), ((), ())),
            preferred_element_type=jnp.float32,
        ) * scale                                        # f32 [tq, Skv]

        m = jnp.max(logits, axis=-1, keepdims=True)
        p = jnp.exp(logits - m)                          # un-normalized probs
        l = jnp.sum(p, axis=-1, keepdims=True)

        ctx = jnp.dot(p.astype(vh.dtype), vh,
                      preferred_element_type=jnp.float32)    # f32 [tq, dv]
        # Deferred normalization on the small [tq, dv] context (EUP recip).
        ctx = ctx * pl.reciprocal(l, approx=True)

        # Fused output projection: sum_h ctx_h @ wo_h == concat(ctx) @ wo.
        acc = acc + jnp.dot(ctx.astype(wo.dtype), wo[h * dv:(h + 1) * dv, :],
                            preferred_element_type=jnp.float32)

    o_ref[0] = acc.astype(o_ref.dtype)                   # single dense store


def attention(q_src, kv_srcs, wo, *, num_heads, scale, q_off, k_loc, v_loc,
              dk_total, dv_total, out_dtype=jnp.float32):
    """Attention + output projection on packed [B, S, width] activations.

    q_src:   [B, Sq, Wq]  (q at lane offset q_off, width dk_total)
    kv_srcs: tuple of [B, Skv, Wi]; k at kv_srcs[k_loc[0]][..., k_loc[1]:+Dk],
             v at kv_srcs[v_loc[0]][..., v_loc[1]:+Dv]
    wo:      [dv_total, Dout]
    """
    B, Sq, Wq = q_src.shape
    Skv = kv_srcs[0].shape[1]
    Dout = wo.shape[1]

    tq = _pick_tile(Sq, 512, 8)        # query tiling; K/V stay resident
    grid = (B, Sq // tq)

    kern = functools.partial(
        attn_kernel, num_heads=num_heads, scale=scale, q_off=q_off,
        k_loc=k_loc, v_loc=v_loc, dk_total=dk_total, dv_total=dv_total)

    in_specs = [pl.BlockSpec((1, tq, Wq), lambda b, qi: (b, qi, 0))]
    for src in kv_srcs:
        in_specs.append(
            pl.BlockSpec((1, Skv, src.shape[-1]), lambda b, qi: (b, 0, 0)))
    in_specs.append(pl.BlockSpec((wo.shape[0], Dout), lambda b, qi: (0, 0)))

    return pl.pallas_call(
        kern,
        out_shape=jax.ShapeDtypeStruct((B, Sq, Dout), out_dtype),
        grid=grid,
        in_specs=in_specs,
        out_specs=pl.BlockSpec((1, tq, Dout), lambda b, qi: (b, qi, 0)),
        compiler_params=pltpu.CompilerParams(
            dimension_semantics=("parallel", "parallel")
        ),
    )(q_src.astype(jnp.bfloat16),
      *[s.astype(jnp.bfloat16) for s in kv_srcs],
      wo.astype(jnp.bfloat16))


# ----------------------------------------------------------------------------
# MultiHeadAttention forward (matches the PyTorch module semantics)
# ----------------------------------------------------------------------------
def multi_head_attention(params, queries, keys, values, num_heads):
    wq, wk, wv, wo = params            # each stored as [in_depth, out_depth]
    B, Sq, Din = queries.shape
    Dk = wq.shape[1]
    Dv = wv.shape[1]
    scale = (Dk // num_heads) ** (-0.5)
    cdt = jnp.bfloat16                 # MXU compute / intermediate dtype

    if (queries is keys) and (queries is values):
        # Self-attention: single fused QKV projection; the packed output is
        # consumed directly by the attention kernel (no slice copies).
        w_qkv = jnp.concatenate([wq, wk, wv], axis=1)        # [Din, 2Dk+Dv]
        qkv = linear(queries.reshape(B * Sq, Din), w_qkv,
                     out_dtype=cdt).reshape(B, Sq, 2 * Dk + Dv)
        q_src, kv_srcs = qkv, (qkv,)
        q_off, k_loc, v_loc = 0, (0, Dk), (0, 2 * Dk)
    elif keys is values:
        # Cross-attention with shared K/V source: fused K/V projection.
        Skv = keys.shape[1]
        q = linear(queries.reshape(B * Sq, Din), wq,
                   out_dtype=cdt).reshape(B, Sq, Dk)
        w_kv = jnp.concatenate([wk, wv], axis=1)             # [Din, Dk+Dv]
        kv = linear(keys.reshape(B * Skv, Din), w_kv,
                    out_dtype=cdt).reshape(B, Skv, Dk + Dv)
        q_src, kv_srcs = q, (kv,)
        q_off, k_loc, v_loc = 0, (0, 0), (0, Dk)
    else:
        # Fully separate q / k / v sources.
        Skv = keys.shape[1]
        q = linear(queries.reshape(B * Sq, Din), wq,
                   out_dtype=cdt).reshape(B, Sq, Dk)
        k = linear(keys.reshape(B * Skv, Din), wk,
                   out_dtype=cdt).reshape(B, Skv, Dk)
        v = linear(values.reshape(B * Skv, Din), wv,
                   out_dtype=cdt).reshape(B, Skv, Dv)
        q_src, kv_srcs = q, (k, v)
        q_off, k_loc, v_loc = 0, (0, 0), (1, 0)

    # Attention + fused output projection -> final [B, Sq, output_depth].
    return attention(q_src, kv_srcs, wo, num_heads=num_heads, scale=scale,
                     q_off=q_off, k_loc=k_loc, v_loc=v_loc,
                     dk_total=Dk, dv_total=Dv, out_dtype=jnp.float32)


# Pure-JAX f32 reference for validation.
def reference_mha(params, queries, keys, values, num_heads):
    wq, wk, wv, wo = params
    q = queries @ wq
    k = keys @ wk
    v = values @ wv

    def split(x):
        b, s, d = x.shape
        return x.reshape(b, s, num_heads, d // num_heads).transpose(0, 2, 1, 3)

    qh, kh, vh = split(q), split(k), split(v)
    scale = qh.shape[-1] ** (-0.5)
    logits = jnp.einsum("bhqd,bhkd->bhqk", qh * scale, kh)
    w = jax.nn.softmax(logits, axis=-1)
    ctx = jnp.einsum("bhqk,bhkd->bhqd", w, vh)
    b, h, s, d = ctx.shape
    ctx = ctx.transpose(0, 2, 1, 3).reshape(b, s, h * d)
    return ctx @ wo


if __name__ == "__main__":
    batch = 2
    seq = 8
    input_depth = 32
    total_key_depth = 32
    total_value_depth = 32
    output_depth = 32
    num_heads = 4

    key = jax.random.PRNGKey(0)
    k0, k1, k2, k3, k4, k5, k6 = jax.random.split(key, 7)

    # Deterministic parameter init (Linear, bias=False), stored as [in, out].
    wq = 0.05 * jax.random.normal(k0, (input_depth, total_key_depth), jnp.float32)
    wk = 0.05 * jax.random.normal(k1, (input_depth, total_key_depth), jnp.float32)
    wv = 0.05 * jax.random.normal(k2, (input_depth, total_value_depth), jnp.float32)
    wo = 0.05 * jax.random.normal(k3, (total_value_depth, output_depth), jnp.float32)
    params = (wq, wk, wv, wo)

    # 1) Self-attention (queries = keys = values): fused-QKV + packed-view path.
    x = jax.random.normal(k4, (batch, seq, input_depth), jnp.float32)
    out = multi_head_attention(params, x, x, x, num_heads)
    out = jax.block_until_ready(out)
    ref = reference_mha(params, x, x, x, num_heads)
    assert out.shape == (batch, seq, output_depth)
    # bf16 MXU operands (f32 accumulation) -> loosened tolerance vs the f32 ref.
    assert jnp.allclose(out, ref, atol=2e-2, rtol=2e-2), (
        f"self-attn max abs err {jnp.max(jnp.abs(out - ref))}"
    )

    # 2) Cross-attention with shared K/V source (keys is values): fused-KV path.
    queries = jax.random.normal(k4, (batch, seq, input_depth), jnp.float32)
    kvx = jax.random.normal(k5, (batch, seq, input_depth), jnp.float32)
    out2 = multi_head_attention(params, queries, kvx, kvx, num_heads)
    out2 = jax.block_until_ready(out2)
    ref2 = reference_mha(params, queries, kvx, kvx, num_heads)
    assert out2.shape == (batch, seq, output_depth)
    assert jnp.allclose(out2, ref2, atol=2e-2, rtol=2e-2), (
        f"shared-kv cross-attn max abs err {jnp.max(jnp.abs(out2 - ref2))}"
    )

    # 3) Fully separate q/k/v tensors: unfused projection path.
    values_x = jax.random.normal(k6, (batch, seq, input_depth), jnp.float32)
    out3 = multi_head_attention(params, queries, kvx, values_x, num_heads)
    out3 = jax.block_until_ready(out3)
    ref3 = reference_mha(params, queries, kvx, values_x, num_heads)
    assert out3.shape == (batch, seq, output_depth)
    assert jnp.allclose(out3, ref3, atol=2e-2, rtol=2e-2), (
        f"cross-attn max abs err {jnp.max(jnp.abs(out3 - ref3))}"
    )

    print("KERNEL_OK")
</pallas_src>

<mosaic_0001>
module attributes {stable_mosaic.version = 11 : i64} {
  func.func @matmul_kernel(%arg0: i32, %arg1: i32, %arg2: i32, %arg3: memref<16x32xbf16, #tpu.memory_space<vmem>>, %arg4: memref<32x96xbf16, #tpu.memory_space<vmem>>, %arg5: memref<16x96xbf16, #tpu.memory_space<vmem>>, %arg6: memref<16x96xf32, #tpu.memory_space<vmem>>) attributes {dimension_semantics = [#tpu.dimension_semantics<parallel>, #tpu.dimension_semantics<parallel>, #tpu.dimension_semantics<arbitrary>], iteration_bounds = array<i64: 1, 1, 1>, scalar_prefetch = 0 : i64, scratch_operands = 1 : i64, tpu.core_type = #tpu.core_type<tc>, window_params = [{transform_indices = @transform_0, window_bounds = array<i64: 16, 32>}, {transform_indices = @transform_1, window_bounds = array<i64: 32, 96>}, {transform_indices = @transform_2, window_bounds = array<i64: 16, 96>}]} {
    %c0_i32 = arith.constant 0 : i32
    %0 = arith.cmpi eq, %arg2, %c0_i32 : i32
    %1 = arith.extui %0 : i1 to i32
    %c0_i32_0 = arith.constant 0 : i32
    %2 = arith.cmpi ne, %1, %c0_i32_0 : i32
    scf.if %2 {
      %cst_10 = arith.constant 0.000000e+00 : f32
      %12 = vector.broadcast %cst_10 : f32 to vector<16x96xf32>
      %c0_11 = arith.constant 0 : index
      %c0_12 = arith.constant 0 : index
      %13 = vector.load %arg6[%c0_11, %c0_12] : memref<16x96xf32, #tpu.memory_space<vmem>>, vector<16x96xf32>
      tpu.vector_store %arg6[%c0_11, %c0_12], %12 {strides = array<i32>} : memref<16x96xf32, #tpu.memory_space<vmem>>, vector<16x96xf32>,
    } else {
    }
    %c0 = arith.constant 0 : index
    %c0_1 = arith.constant 0 : index
    %3 = vector.load %arg6[%c0, %c0_1] : memref<16x96xf32, #tpu.memory_space<vmem>>, vector<16x96xf32>
    %c0_2 = arith.constant 0 : index
    %c0_3 = arith.constant 0 : index
    %4 = vector.load %arg3[%c0_2, %c0_3] : memref<16x32xbf16, #tpu.memory_space<vmem>>, vector<16x32xbf16>
    %c0_4 = arith.constant 0 : index
    %c0_5 = arith.constant 0 : index
    %5 = vector.load %arg4[%c0_4, %c0_5] : memref<32x96xbf16, #tpu.memory_space<vmem>>, vector<32x96xbf16>
    %cst = arith.constant dense<0.000000e+00> : vector<16x96xf32>
    %6 = tpu.matmul %4, %5, %cst {dimension_numbers = #tpu.dot_dimension_numbers<[1], [0], [0], [1], [0, 0, 1, 1], [], []>} : vector<16x32xbf16>, vector<32x96xbf16>, vector<16x96xf32> -> vector<16x96xf32>
    %7 = arith.addf %3, %6 : vector<16x96xf32>
    %c0_6 = arith.constant 0 : index
    %c0_7 = arith.constant 0 : index
    %8 = vector.load %arg6[%c0_6, %c0_7] : memref<16x96xf32, #tpu.memory_space<vmem>>, vector<16x96xf32>
    tpu.vector_store %arg6[%c0_6, %c0_7], %7 {strides = array<i32>} : memref<16x96xf32, #tpu.memory_space<vmem>>, vector<16x96xf32>,
    %c0_i32_8 = arith.constant 0 : i32
    %9 = arith.cmpi eq, %arg2, %c0_i32_8 : i32
    %10 = arith.extui %9 : i1 to i32
    %c0_i32_9 = arith.constant 0 : i32
    %11 = arith.cmpi ne, %10, %c0_i32_9 : i32
    scf.if %11 {
      %c0_10 = arith.constant 0 : index
      %c0_11 = arith.constant 0 : index
      %12 = vector.load %arg6[%c0_10, %c0_11] : memref<16x96xf32, #tpu.memory_space<vmem>>, vector<16x96xf32>
      %13 = arith.truncf %12 : vector<16x96xf32> to vector<16x96xbf16>
      %c0_12 = arith.constant 0 : index
      %c0_13 = arith.constant 0 : index
      %14 = vector.load %arg5[%c0_12, %c0_13] : memref<16x96xbf16, #tpu.memory_space<vmem>>, vector<16x96xbf16>
      tpu.vector_store %arg5[%c0_12, %c0_13], %13 {strides = array<i32>} : memref<16x96xbf16, #tpu.memory_space<vmem>>, vector<16x96xbf16>,
    } else {
    }
    return
  }
  func.func @transform_0(%arg0: i32, %arg1: i32, %arg2: i32) -> (i32, i32) {
    %c0_i32 = arith.constant 0 : i32
    return %arg0, %arg2 : i32, i32
  }
  func.func @transform_1(%arg0: i32, %arg1: i32, %arg2: i32) -> (i32, i32) {
    %c0_i32 = arith.constant 0 : i32
    return %arg2, %arg1 : i32, i32
  }
  func.func @transform_2(%arg0: i32, %arg1: i32, %arg2: i32) -> (i32, i32) {
    %c0_i32 = arith.constant 0 : i32
    return %arg0, %arg1 : i32, i32
  }
}

</mosaic_0001>

<llo_original>
// kernel: tpu_custom_call.1
$region0: #{tpu_custom_call.1}
  #allocation0 [shape = 'u32[]', space=smem, size = 0x4, offset = 0x4, fixed_abs, tag = 'smem constant byte address 0x4 - core index']
  #allocation1 [shape = 'u32[144,128]{1,0:T(1,128)}', space=vmem, size = 0x12000, scoped, tag = 'internal scratch']
  #allocation2 [shape = 'f32[16,96]{1,0:T(8,128)}', space=vmem, size = 0x2000, scoped, tag = 'scratch operand']
  %s0 = inlined_call_operand.hbm [shape: bf16[16,32], index: 0, kind: input, shape index: {}]
  %s1 = inlined_call_operand.hbm [shape: bf16[32,96], index: 1, kind: input, shape index: {}]
  %s2 = inlined_call_operand.hbm [shape: bf16[16,96], index: 2, kind: output, shape index: {}]
  %s3 = sld [smem:[#allocation0]]
  $region34: #{tpu_custom_call.1} parent=0
    _
  %s5 = ssub.s32 1, %s3
  %s6 = scalar_select 0, %s5, %s3
  $region1: #{tpu_custom_call.1} parent=0
    #allocation3 [shape = 'u8[4096]{0}', space=vmem, size = 0x1000, scoped, tag = 'input window, operand 0, single buffered']
    #allocation4 [shape = 's32[1]{0}', space=sflag, size = 0x4, scoped, tag = 'scoped memory for tpu_custom_call.1']
    #allocation5 [shape = 's32[1]{0}', space=sflag, size = 0x4, scoped, tag = 'scoped memory for tpu_custom_call.1']
    #allocation6 [shape = 'u8[8192]{0}', space=vmem, size = 0x2000, scoped, tag = 'input window, operand 1, single buffered']
    #allocation7 [shape = 's32[1]{0}', space=sflag, size = 0x4, scoped, tag = 'scoped memory for tpu_custom_call.1']
    #allocation8 [shape = 'u8[4096]{0}', space=vmem, size = 0x1000, scoped, tag = 'output window, operand 0, single buffered']
    %7 = vsyncpa [#allocation4], 0
    %8 = vsyncpa [#allocation7], 0
    %9 = vsyncpa [#allocation5], 0
    // Predicated region
    $region2: #{tpu_custom_call.1} parent=1 // pred_check
      _
    $region3: #{tpu_custom_call.1} parent=1 // pred_check_branch
      %11 = sbr.rel (0) target = $region5
    $region4: #{tpu_custom_call.1} parent=1 // pred_region
      %s13 = ssub.s32 128, 128
      %14 = vsyncadd [#allocation4], %s13
      %s15 = sshll.u32 [#allocation3], 4
      %s16 = int_to_ptr.vmem [resolvable:$true] %s15
      %21 = dma.hbm_to_vmem [thread:$0]  %s0, 128, %s16, [#allocation4], 64, 64, 4
    $region5: #{tpu_custom_call.1} parent=1 // pred_fallthru
      _
    // Predicated region
    $region6: #{tpu_custom_call.1} parent=1 // pred_check
      _
    $region7: #{tpu_custom_call.1} parent=1 // pred_check_branch
      %23 = sbr.rel (0) target = $region9
    $region8: #{tpu_custom_call.1} parent=1 // pred_region
      %s25 = ssub.s32 256, 256
      %26 = vsyncadd [#allocation7], %s25
      %s27 = sshll.u32 [#allocation6], 4
      %s28 = int_to_ptr.vmem [resolvable:$true] %s27
      %33 = dma.hbm_to_vmem [thread:$0]  %s1, 256, %s28, [#allocation7], 64, 64, 4
    $region9: #{tpu_custom_call.1} parent=1 // pred_fallthru
      _
    // Predicated region
    $region10: #{tpu_custom_call.1} parent=1 // pred_check
      _
    $region11: #{tpu_custom_call.1} parent=1 // pred_check_branch
      %35 = sbr.rel (0) target = $region13
    $region12: #{tpu_custom_call.1} parent=1 // pred_region
      %36 = dma.done [#allocation4], 128
    $region13: #{tpu_custom_call.1} parent=1 // pred_fallthru
      _
    // Predicated region
    $region14: #{tpu_custom_call.1} parent=1 // pred_check
      _
    $region15: #{tpu_custom_call.1} parent=1 // pred_check_branch
      %38 = sbr.rel (0) target = $region17
    $region16: #{tpu_custom_call.1} parent=1 // pred_region
      %39 = dma.done [#allocation7], 256
    $region17: #{tpu_custom_call.1} parent=1 // pred_fallthru
      _
    %p41 = scmp.eq.s32.totalorder 0, 0
    // Predicated region
    $region18: #{tpu_custom_call.1} parent=1 // pred_check
      %p42 = pneg %p41
    $region19: #{tpu_custom_call.1} parent=1 // pred_check_branch
      %44 = sbr.rel (%p42) target = $region21
    $region20: #{tpu_custom_call.1} parent=1 // pred_region
      %vm45 = vcmask 785408
      %46 = vst.msk [vmem:[#allocation2] sm:$0xff] %vm45, 0.0
      %47 = vst.msk [vmem:[#allocation2 + $0x8] sm:$0xff] %vm45, 0.0
    $region21: #{tpu_custom_call.1} parent=1 // pred_fallthru
      _
    %v48 = vld [vmem:[#allocation2] sm:$0xff]
    %v49 = vld [vmem:[#allocation2 + $0x8] sm:$0xff]
    %v50 = vld [vmem:[#allocation3] sm:$0xf]
    %v51 = vld [vmem:[#allocation3 + $0x4] sm:$0xf]
    %v52 = vld [vmem:[#allocation6] sm:$0xf]
    %v53 = vld [vmem:[#allocation6 + $0x4] sm:$0xf]
    %v54 = vld [vmem:[#allocation6 + $0x8] sm:$0xf]
    %v55 = vld [vmem:[#allocation6 + $0xc] sm:$0xf]
    %v58 = vunpack.c.l.b16 %v50
    %v59 = vunpack.c.l.b16 %v51
    %v60 = vpack.c.b16 %v59, %v58
    %v65 = vunpack.c.l.b16 %v52
    %v66 = vunpack.c.l.b16 %v53
    %v67 = vunpack.c.l.b16 %v54
    %v68 = vunpack.c.l.b16 %v55
    %v69 = vpack.c.b16 %v66, %v65
    %v70 = vpack.c.b16 %v68, %v67
    %vm73 = vcmask 261120
    %v75 = vsel %vm73, %v60, 0
    %77 = vmatprep.subr.bf16.mxu0 0
    %78 = vmatpush1.bf16.msra.mxu0 %v69
    %79 = vmatprep.subr.bf16.mxu0 0
    %80 = vmatpush1.bf16.msra.mxu0 %v70
    %81 = vmatprep.subr.bf16.mxu0 0
    %82 = vmatpush1.bf16.msra.mxu0 0
    %83 = vmatprep.subr.bf16.mxu0 0
    %84 = vmatpush1.bf16.msra.mxu0 0
    %85 = vmatprep.subr.bf16.mxu0 0
    %86 = vmatpush1.bf16.msra.mxu0 0
    %87 = vmatprep.subr.bf16.mxu0 0
    %88 = vmatpush1.bf16.msra.mxu0 0
    %89 = vmatprep.subr.bf16.mxu0 0
    %90 = vmatpush1.bf16.msra.mxu0 0
    %91 = vmatprep.subr.bf16.mxu0 0
    %92 = vmatpush1.bf16.msra.mxu0 0
    %93 = vmatprep.subr.bf16.mxu0 0
    %94 = vmatpush1.bf16.msra.mxu0 0
    %95 = vmatprep.subr.bf16.mxu0 0
    %96 = vmatpush1.bf16.msra.mxu0 0
    %97 = vmatprep.subr.bf16.mxu0 0
    %98 = vmatpush1.bf16.msra.mxu0 0
    %99 = vmatprep.subr.bf16.mxu0 0
    %100 = vmatpush1.bf16.msra.mxu0 0
    %101 = vmatprep.subr.bf16.mxu0 0
    %102 = vmatpush1.bf16.msra.mxu0 0
    %103 = vmatprep.subr.bf16.mxu0 0
    %104 = vmatpush1.bf16.msra.mxu0 0
    %105 = vmatprep.subr.bf16.mxu0 0
    %106 = vmatpush1.bf16.msra.mxu0 0
    %107 = vmatprep.subr.bf16.mxu0 0
    %108 = vmatpush1.bf16.msra.mxu0 0
    %109 = vmatprep.mubr.bf16.mxu0 0
    %110 = vmatmul.mubr.bf16.gmra.mrb[0].mxu0 %v75
    %v111 = vpop.f32.mrb[0].mxu0
    %v112 = vadd.f32 0.0, %v111
    %v113 = vpop.f32.mrb[0].mxu0
    %v114 = vpop.f32.mrb[0].mxu0
    %v115 = vadd.f32 0.0, %v114
    %v116 = vpop.f32.mrb[0].mxu0
    %117 = vdwg.mxu0
    %v118 = vadd.f32 %v48, %v112
    %v119 = vadd.f32 %v49, %v115
    %vm120 = vcmask 785408
    %121 = vst.msk [vmem:[#allocation2] sm:$0xff] %vm120, %v118
    %122 = vst.msk [vmem:[#allocation2 + $0x8] sm:$0xff] %vm120, %v119
    // Predicated region
    $region22: #{tpu_custom_call.1} parent=1 // pred_check
      %p123 = pneg %p41
    $region23: #{tpu_custom_call.1} parent=1 // pred_check_branch
      %125 = sbr.rel (%p123) target = $region25
    $region24: #{tpu_custom_call.1} parent=1 // pred_region
      %v126 = vld [vmem:[#allocation2] sm:$0xff]
      %v127 = vld [vmem:[#allocation2 + $0x8] sm:$0xff]
      %v128 = vpack.c.bf16 %v127, %v126
      %v130 = vunpack.c.l.b16 %v128
      %v131 = vunpack.c.h.b16 %v128
      %v132 = vpack.c.b16 %v130, %v130
      %v133 = vpack.c.b16 %v131, %v131
      %vm136 = vcmask 781312
      %137 = vst.msk [vmem:[#allocation8] sm:$0xf] %vm136, %v132
      %138 = vst.msk [vmem:[#allocation8 + $0x4] sm:$0xf] %vm136, %v133
    $region25: #{tpu_custom_call.1} parent=1 // pred_fallthru
      _
    // Predicated region
    $region26: #{tpu_custom_call.1} parent=1 // pred_check
      _
    $region27: #{tpu_custom_call.1} parent=1 // pred_check_branch
      %140 = sbr.rel (0) target = $region29
    $region28: #{tpu_custom_call.1} parent=1 // pred_region
      %s142 = ssub.s32 128, 128
      %143 = vsyncadd [#allocation5], %s142
      %s144 = sshll.u32 [#allocation8], 4
      %s145 = int_to_ptr.vmem [resolvable:$true] %s144
      %150 = dma.vmem_to_hbm [thread:$0]  %s145, 128, %s2, [#allocation5], 64, 64, 4
    $region29: #{tpu_custom_call.1} parent=1 // pred_fallthru
      _
    // Predicated region
    $region30: #{tpu_custom_call.1} parent=1 // pred_check
      _
    $region31: #{tpu_custom_call.1} parent=1 // pred_check_branch
      %152 = sbr.rel (0) target = $region33
    $region32: #{tpu_custom_call.1} parent=1 // pred_region
      %153 = dma.done [#allocation5], 128
    $region33: #{tpu_custom_call.1} parent=1 // pred_fallthru
      _
    %154 = vsyncpa [#allocation4], 1
    %155 = vsyncpa [#allocation7], 1
    %156 = vsyncpa [#allocation5], 1

</llo_original>
